<compile_context>
chip_gen: v7x
topology: tpu7x:2x2x1
jax: 0.10.0
libtpu: 0.0.40
codegen_flags: <defaults>
</compile_context>

<pallas_src>
import functools

import jax
import jax.numpy as jnp
from jax.experimental import pallas as pl
from jax.experimental.pallas import tpu as pltpu

IN_FEATURES = 32
HIDDEN = 64
OUT_FEATURES = 10
OUT_PAD = 16              # pad 10 -> 16 output rows (sublanes), NOT 128 lanes
TB_MAX = 4096             # batch tile cap (double-buffered working set ~1.5 MiB)
TB_SINGLE = 256           # up to this batch, use a single tile covering B
PALLAS_MIN_BATCH = 128    # below this (and not force_pallas) use fused XLA path


def _round_up(x, m):
    return (x + m - 1) // m * m


def _mlp_kernel(x_ref, w1_ref, b1_ref, w2_ref, b2_ref, o_ref):
    # x_ref : (TB, 32) f32      w1_ref: (32, 64) f32     b1_ref: (1, 64) f32
    # w2_ref: (16, 64) f32 (rows 10..15 zero)            b2_ref: (16, 1) f32
    # o_ref : (16, TB) f32  -- transposed, sublane-padded output block
    h = jnp.dot(x_ref[...], w1_ref[...], preferred_element_type=jnp.float32)
    h = jnp.maximum(h + b1_ref[...], 0.0)                          # (TB, 64)
    # y^T = W2_p @ h^T : contract the hidden dim (last dim of both operands);
    # the MXU handles the transposed-RHS contraction, XLU is idle anyway.
    y_t = jax.lax.dot_general(
        w2_ref[...], h,
        dimension_numbers=(((1,), (1,)), ((), ())),
        preferred_element_type=jnp.float32)                        # (16, TB)
    o_ref[...] = (y_t + b2_ref[...]).astype(o_ref.dtype)


def prepare_classifier_params(w1, b1, w2, b2):
    """One-time prep of PyTorch-layout params into kernel layout (all f32).

    w1: (64, 32), b1: (64,), w2: (10, 64), b2: (10,)
    """
    w1_t = jnp.transpose(jnp.asarray(w1, jnp.float32))                        # (32, 64)
    b1_r = jnp.asarray(b1, jnp.float32).reshape(1, HIDDEN)                    # (1, 64)
    w2_p = jnp.zeros((OUT_PAD, HIDDEN), jnp.float32).at[:OUT_FEATURES].set(
        jnp.asarray(w2, jnp.float32))                                         # (16, 64)
    b2_p = jnp.zeros((OUT_PAD, 1), jnp.float32).at[:OUT_FEATURES, 0].set(
        jnp.asarray(b2, jnp.float32))                                         # (16, 1)
    return w1_t, b1_r, w2_p, b2_p


@functools.partial(jax.jit, static_argnames=("force_pallas",))
def classifier_forward(x, params, force_pallas=False):
    """Forward pass: (B, 32) f32 -> (B, 10) f32 logits."""
    w1_t, b1_r, w2_p, b2_p = params
    B = x.shape[0]

    if (not force_pallas) and B < PALLAS_MIN_BATCH:
        # Tiny batches: let XLA fuse the two matmuls + ReLU (lower overhead).
        h = jnp.maximum(x @ w1_t + b1_r, 0.0)
        return h @ jnp.transpose(w2_p)[:, :OUT_FEATURES] + b2_p[:OUT_FEATURES, 0]

    # --- Pallas path: batch-tiled, pipelined, f32 end-to-end -----------------
    # Tile selection: one tile for small B; otherwise a 128-multiple tile with
    # at least 2 grid steps so both v7x TensorCores are used.
    if B <= TB_SINGLE:
        TB = B
    else:
        TB = min(TB_MAX, _round_up(pl.cdiv(B, 2), 128))
    grid = (pl.cdiv(B, TB),)  # ragged tail handled by Pallas partial edge block

    weight_bytes = 4 * (IN_FEATURES * HIDDEN + HIDDEN
                        + OUT_PAD * HIDDEN + OUT_PAD)
    cost = pl.CostEstimate(
        flops=2 * B * (IN_FEATURES * HIDDEN + HIDDEN * OUT_PAD),
        transcendentals=0,
        bytes_accessed=B * 4 * (IN_FEATURES + OUT_PAD) + weight_bytes,
    )

    out_t = pl.pallas_call(
        _mlp_kernel,
        out_shape=jax.ShapeDtypeStruct((OUT_PAD, B), jnp.float32),
        grid=grid,
        in_specs=[
            # x: one batch tile per grid step (pipelined / double-buffered).
            pl.BlockSpec((TB, IN_FEATURES), lambda i: (i, 0)),
            # Weights / biases: constant index_maps -> VMEM-resident across grid.
            pl.BlockSpec((IN_FEATURES, HIDDEN), lambda i: (0, 0)),
            pl.BlockSpec((1, HIDDEN), lambda i: (0, 0)),
            pl.BlockSpec((OUT_PAD, HIDDEN), lambda i: (0, 0)),
            pl.BlockSpec((OUT_PAD, 1), lambda i: (0, 0)),
        ],
        # Transposed, lane-dense output: batch is the lane dimension.
        out_specs=pl.BlockSpec((OUT_PAD, TB), lambda i: (0, i)),
        compiler_params=pltpu.CompilerParams(
            dimension_semantics=("parallel",)),   # shards grid across v7x TCs
        cost_estimate=cost,
    )(x, w1_t, b1_r, w2_p, b2_p)

    # Cheap wrapper fixup: slice the 10 valid rows and transpose the tiny
    # (10, B) array back to (B, 10).
    return jnp.transpose(out_t[:OUT_FEATURES, :])


def _reference_forward(x, w1, b1, w2, b2):
    h = jnp.maximum(x @ w1.T + b1, 0.0)
    return h @ w2.T + b2


if __name__ == "__main__":
    key = jax.random.PRNGKey(0)
    k_x, k_w1, k_b1, k_w2, k_b2 = jax.random.split(key, 5)

    B = 8  # small batch for the self-test
    x = jax.random.normal(k_x, (B, IN_FEATURES), dtype=jnp.float32)
    w1 = jax.random.uniform(k_w1, (HIDDEN, IN_FEATURES), jnp.float32,
                            minval=-1.0 / jnp.sqrt(float(IN_FEATURES)),
                            maxval=1.0 / jnp.sqrt(float(IN_FEATURES)))
    b1 = jax.random.uniform(k_b1, (HIDDEN,), jnp.float32,
                            minval=-1.0 / jnp.sqrt(float(IN_FEATURES)),
                            maxval=1.0 / jnp.sqrt(float(IN_FEATURES)))
    w2 = jax.random.uniform(k_w2, (OUT_FEATURES, HIDDEN), jnp.float32,
                            minval=-1.0 / jnp.sqrt(float(HIDDEN)),
                            maxval=1.0 / jnp.sqrt(float(HIDDEN)))
    b2 = jax.random.uniform(k_b2, (OUT_FEATURES,), jnp.float32,
                            minval=-1.0 / jnp.sqrt(float(HIDDEN)),
                            maxval=1.0 / jnp.sqrt(float(HIDDEN)))

    # One-time parameter prep (transpose / pad), then run the Pallas kernel.
    params = prepare_classifier_params(w1, b1, w2, b2)
    out = classifier_forward(x, params, force_pallas=True)
    out = jax.block_until_ready(out)

    ref = _reference_forward(x, w1, b1, w2, b2)
    assert out.shape == (B, OUT_FEATURES)
    # Everything is f32 now (no bf16 trade-off) -> tight tolerance.
    assert jnp.allclose(out, ref, atol=1e-4, rtol=1e-4), "mismatch vs reference"

    print("KERNEL_OK")
</pallas_src>

<mosaic_0001>
module attributes {stable_mosaic.version = 11 : i64} {
  func.func @_mlp_kernel(%arg0: i32, %arg1: memref<8x32xf32, #tpu.memory_space<vmem>>, %arg2: memref<32x64xf32, #tpu.memory_space<vmem>>, %arg3: memref<1x64xf32, #tpu.memory_space<vmem>>, %arg4: memref<16x64xf32, #tpu.memory_space<vmem>>, %arg5: memref<16x1xf32, #tpu.memory_space<vmem>>, %arg6: memref<16x8xf32, #tpu.memory_space<vmem>>) attributes {dimension_semantics = [#tpu.dimension_semantics<parallel>], iteration_bounds = array<i64: 1>, scalar_prefetch = 0 : i64, scratch_operands = 0 : i64, tpu.core_type = #tpu.core_type<tc>, window_params = [{transform_indices = @transform_0, window_bounds = array<i64: 8, 32>}, {pipeline_mode = #tpu.pipeline_mode<synchronous>, transform_indices = @transform_1, window_bounds = array<i64: 32, 64>}, {pipeline_mode = #tpu.pipeline_mode<synchronous>, transform_indices = @transform_2, window_bounds = array<i64: 1, 64>}, {pipeline_mode = #tpu.pipeline_mode<synchronous>, transform_indices = @transform_3, window_bounds = array<i64: 16, 64>}, {pipeline_mode = #tpu.pipeline_mode<synchronous>, transform_indices = @transform_4, window_bounds = array<i64: 16, 1>}, {transform_indices = @transform_5, window_bounds = array<i64: 16, 8>}]} {
    %c0 = arith.constant 0 : index
    %c0_0 = arith.constant 0 : index
    %0 = vector.load %arg1[%c0, %c0_0] : memref<8x32xf32, #tpu.memory_space<vmem>>, vector<8x32xf32>
    %c0_1 = arith.constant 0 : index
    %c0_2 = arith.constant 0 : index
    %1 = vector.load %arg2[%c0_1, %c0_2] : memref<32x64xf32, #tpu.memory_space<vmem>>, vector<32x64xf32>
    %cst = arith.constant dense<0.000000e+00> : vector<8x64xf32>
    %2 = tpu.matmul %0, %1, %cst {dimension_numbers = #tpu.dot_dimension_numbers<[1], [0], [0], [1], [0, 0, 1, 1], [], []>} : vector<8x32xf32>, vector<32x64xf32>, vector<8x64xf32> -> vector<8x64xf32>
    %c0_3 = arith.constant 0 : index
    %c0_4 = arith.constant 0 : index
    %3 = vector.load %arg3[%c0_3, %c0_4] : memref<1x64xf32, #tpu.memory_space<vmem>>, vector<1x64xf32>
    %4 = vector.broadcast %3 : vector<1x64xf32> to vector<8x64xf32>
    %5 = arith.addf %2, %4 : vector<8x64xf32>
    %cst_5 = arith.constant 0.000000e+00 : f32
    %6 = vector.broadcast %cst_5 : f32 to vector<8x64xf32>
    %7 = arith.maximumf %5, %6 : vector<8x64xf32>
    %c0_6 = arith.constant 0 : index
    %c0_7 = arith.constant 0 : index
    %8 = vector.load %arg4[%c0_6, %c0_7] : memref<16x64xf32, #tpu.memory_space<vmem>>, vector<16x64xf32>
    %cst_8 = arith.constant dense<0.000000e+00> : vector<16x8xf32>
    %9 = tpu.matmul %8, %7, %cst_8 {dimension_numbers = #tpu.dot_dimension_numbers<[1], [1], [0], [0], [0, 0, 1, 0], [], []>} : vector<16x64xf32>, vector<8x64xf32>, vector<16x8xf32> -> vector<16x8xf32>
    %c0_9 = arith.constant 0 : index
    %c0_10 = arith.constant 0 : index
    %10 = vector.load %arg5[%c0_9, %c0_10] : memref<16x1xf32, #tpu.memory_space<vmem>>, vector<16x1xf32>
    %11 = vector.broadcast %10 : vector<16x1xf32> to vector<16x8xf32>
    %12 = arith.addf %9, %11 : vector<16x8xf32>
    %c0_11 = arith.constant 0 : index
    %c0_12 = arith.constant 0 : index
    %13 = vector.load %arg6[%c0_11, %c0_12] : memref<16x8xf32, #tpu.memory_space<vmem>>, vector<16x8xf32>
    tpu.vector_store %arg6[%c0_11, %c0_12], %12 {strides = array<i32>} : memref<16x8xf32, #tpu.memory_space<vmem>>, vector<16x8xf32>,
    return
  }
  func.func @transform_0(%arg0: i32) -> (i32, i32) {
    %c0_i32 = arith.constant 0 : i32
    %c0_i32_0 = arith.constant 0 : i32
    return %arg0, %c0_i32 : i32, i32
  }
  func.func @transform_1(%arg0: i32) -> (i32, i32) {
    %c0_i32 = arith.constant 0 : i32
    %c0_i32_0 = arith.constant 0 : i32
    %c0_i32_1 = arith.constant 0 : i32
    return %c0_i32, %c0_i32_0 : i32, i32
  }
  func.func @transform_2(%arg0: i32) -> (i32, i32) {
    %c0_i32 = arith.constant 0 : i32
    %c0_i32_0 = arith.constant 0 : i32
    %c0_i32_1 = arith.constant 0 : i32
    return %c0_i32, %c0_i32_0 : i32, i32
  }
  func.func @transform_3(%arg0: i32) -> (i32, i32) {
    %c0_i32 = arith.constant 0 : i32
    %c0_i32_0 = arith.constant 0 : i32
    %c0_i32_1 = arith.constant 0 : i32
    return %c0_i32, %c0_i32_0 : i32, i32
  }
  func.func @transform_4(%arg0: i32) -> (i32, i32) {
    %c0_i32 = arith.constant 0 : i32
    %c0_i32_0 = arith.constant 0 : i32
    %c0_i32_1 = arith.constant 0 : i32
    return %c0_i32, %c0_i32_0 : i32, i32
  }
  func.func @transform_5(%arg0: i32) -> (i32, i32) {
    %c0_i32 = arith.constant 0 : i32
    %c0_i32_0 = arith.constant 0 : i32
    return %c0_i32, %arg0 : i32, i32
  }
}

</mosaic_0001>

<llo_original>
// kernel: classifier_forward.1
$region0: #{classifier_forward.1}
  #allocation0 [shape = 'u32[]', space=smem, size = 0x4, offset = 0x4, fixed_abs, tag = 'smem constant byte address 0x4 - core index']
  #allocation1 [shape = 'u32[144,128]{1,0:T(1,128)}', space=vmem, size = 0x12000, scoped, tag = 'internal scratch']
  %s0 = inlined_call_operand.vmem [shape: f32[8,32], index: 0, kind: input, shape index: {}]
  %s1 = inlined_call_operand.hbm [shape: f32[32,64], index: 1, kind: input, shape index: {}]
  %s2 = inlined_call_operand.vmem [shape: f32[1,64], index: 2, kind: input, shape index: {}]
  %s3 = inlined_call_operand.vmem [shape: f32[16,64], index: 3, kind: input, shape index: {}]
  %s4 = inlined_call_operand.vmem [shape: f32[16,1], index: 4, kind: input, shape index: {}]
  %s5 = inlined_call_operand.vmem [shape: f32[16,8], index: 5, kind: output, shape index: {}]
  %s6 = sld [smem:[#allocation0]]
  $region34: #{classifier_forward.1} parent=0
    _
  %s8 = ssub.s32 1, %s6
  %s9 = scalar_select 0, %s8, %s6
  $region1: #{classifier_forward.1} parent=0
    #allocation2 [shape = 'u8[16384]{0}', space=vmem, size = 0x4000, scoped, tag = 'input window, operand 1, single buffered']
    #allocation3 [shape = 's32[1]{0}', space=sflag, size = 0x4, scoped, tag = 'scoped memory for classifier_forward.1']
    %10 = vsyncpa [#allocation3], 0
    // Predicated region
    $region2: #{classifier_forward.1} parent=1 // pred_check
      _
    $region3: #{classifier_forward.1} parent=1 // pred_check_branch
      %12 = sbr.rel (0) target = $region5
    $region4: #{classifier_forward.1} parent=1 // pred_region
      _
    $region5: #{classifier_forward.1} parent=1 // pred_fallthru
      _
    // Predicated region
    $region6: #{classifier_forward.1} parent=1 // pred_check
      _
    $region7: #{classifier_forward.1} parent=1 // pred_check_branch
      %14 = sbr.rel (0) target = $region9
    $region8: #{classifier_forward.1} parent=1 // pred_region
      %s16 = ssub.s32 512, 512
      %17 = vsyncadd [#allocation3], %s16
      %s18 = sshll.u32 [#allocation2], 4
      %s19 = int_to_ptr.vmem [resolvable:$true] %s18
      %24 = dma.hbm_to_vmem [thread:$0]  %s1, 512, %s19, [#allocation3], 128, 128, 8
    $region9: #{classifier_forward.1} parent=1 // pred_fallthru
      _
    // Predicated region
    $region10: #{classifier_forward.1} parent=1 // pred_check
      _
    $region11: #{classifier_forward.1} parent=1 // pred_check_branch
      %26 = sbr.rel (0) target = $region13
    $region12: #{classifier_forward.1} parent=1 // pred_region
      _
    $region13: #{classifier_forward.1} parent=1 // pred_fallthru
      _
    // Predicated region
    $region14: #{classifier_forward.1} parent=1 // pred_check
      _
    $region15: #{classifier_forward.1} parent=1 // pred_check_branch
      %28 = sbr.rel (0) target = $region17
    $region16: #{classifier_forward.1} parent=1 // pred_region
      _
    $region17: #{classifier_forward.1} parent=1 // pred_fallthru
      _
    // Predicated region
    $region18: #{classifier_forward.1} parent=1 // pred_check
      _
    $region19: #{classifier_forward.1} parent=1 // pred_check_branch
      %30 = sbr.rel (0) target = $region21
    $region20: #{classifier_forward.1} parent=1 // pred_region
      _
    $region21: #{classifier_forward.1} parent=1 // pred_fallthru
      _
    // Predicated region
    $region22: #{classifier_forward.1} parent=1 // pred_check
      _
    $region23: #{classifier_forward.1} parent=1 // pred_check_branch
      %32 = sbr.rel (0) target = $region25
    $region24: #{classifier_forward.1} parent=1 // pred_region
      %33 = dma.done [#allocation3], 512
    $region25: #{classifier_forward.1} parent=1 // pred_fallthru
      _
    %v34 = vld [vmem:[%s0] sm:$0xff]
    %v35 = vld [vmem:[#allocation2] sm:$0xff]
    %v36 = vld [vmem:[#allocation2 + $0x8] sm:$0xff]
    %v37 = vld [vmem:[#allocation2 + $0x10] sm:$0xff]
    %v38 = vld [vmem:[#allocation2 + $0x18] sm:$0xff]
    %v39 = vld [vmem:[%s2] sm:$0x1]
    %v41 = vlaneseq
    %v42 = vshrl.u32 %v41, 7
    %v43 = vsub.s32 0, %v42
    %v44 = vrot.slane %v39, %v43
    %vm46 = vcmask 261120
    %v48 = vsel %vm46, %v34, 0
    %50 = vmatprep.subr.mxu0 0.0
    %51 = vmatpush1.msra.mxu0 %v35
    %52 = vmatprep.subr.mxu0 0.0
    %53 = vmatpush1.msra.mxu0 %v36
    %54 = vmatprep.subr.mxu0 0.0
    %55 = vmatpush1.msra.mxu0 %v37
    %56 = vmatprep.subr.mxu0 0.0
    %57 = vmatpush1.msra.mxu0 %v38
    %58 = vmatprep.subr.mxu0 0.0
    %59 = vmatpush1.msra.mxu0 0.0
    %60 = vmatprep.subr.mxu0 0.0
    %61 = vmatpush1.msra.mxu0 0.0
    %62 = vmatprep.subr.mxu0 0.0
    %63 = vmatpush1.msra.mxu0 0.0
    %64 = vmatprep.subr.mxu0 0.0
    %65 = vmatpush1.msra.mxu0 0.0
    %66 = vmatprep.subr.mxu0 0.0
    %67 = vmatpush1.msra.mxu0 0.0
    %68 = vmatprep.subr.mxu0 0.0
    %69 = vmatpush1.msra.mxu0 0.0
    %70 = vmatprep.subr.mxu0 0.0
    %71 = vmatpush1.msra.mxu0 0.0
    %72 = vmatprep.subr.mxu0 0.0
    %73 = vmatpush1.msra.mxu0 0.0
    %74 = vmatprep.subr.mxu0 0.0
    %75 = vmatpush1.msra.mxu0 0.0
    %76 = vmatprep.subr.mxu0 0.0
    %77 = vmatpush1.msra.mxu0 0.0
    %78 = vmatprep.subr.mxu0 0.0
    %79 = vmatpush1.msra.mxu0 0.0
    %80 = vmatprep.subr.mxu0 0.0
    %81 = vmatpush1.msra.mxu0 0.0
    %82 = vmatprep.subr.mxu0 0.0
    %83 = vmatpush1.msra.mxu0 0.0
    %84 = vmatprep.subr.mxu0 0.0
    %85 = vmatpush1.msra.mxu0 0.0
    %86 = vmatprep.subr.mxu0 0.0
    %87 = vmatpush1.msra.mxu0 0.0
    %88 = vmatprep.subr.mxu0 0.0
    %89 = vmatpush1.msra.mxu0 0.0
    %90 = vmatprep.subr.mxu0 0.0
    %91 = vmatpush1.msra.mxu0 0.0
    %92 = vmatprep.subr.mxu0 0.0
    %93 = vmatpush1.msra.mxu0 0.0
    %94 = vmatprep.subr.mxu0 0.0
    %95 = vmatpush1.msra.mxu0 0.0
    %96 = vmatprep.subr.mxu0 0.0
    %97 = vmatpush1.msra.mxu0 0.0
    %98 = vmatprep.subr.mxu0 0.0
    %99 = vmatpush1.msra.mxu0 0.0
    %100 = vmatprep.subr.mxu0 0.0
    %101 = vmatpush1.msra.mxu0 0.0
    %102 = vmatprep.subr.mxu0 0.0
    %103 = vmatpush1.msra.mxu0 0.0
    %104 = vmatprep.subr.mxu0 0.0
    %105 = vmatpush1.msra.mxu0 0.0
    %106 = vmatprep.subr.mxu0 0.0
    %107 = vmatpush1.msra.mxu0 0.0
    %108 = vmatprep.subr.mxu0 0.0
    %109 = vmatpush1.msra.mxu0 0.0
    %110 = vmatprep.subr.mxu0 0.0
    %111 = vmatpush1.msra.mxu0 0.0
    %112 = vmatprep.subr.mxu0 0.0
    %113 = vmatpush1.msra.mxu0 0.0
    %114 = vmatprep.mubr.f32.mxu0 0.0
    %115 = vmatmul.mubr.f32.gmra.mrb[0].mxu0 %v48
    %v116 = vpop.f32.mrb[0].mxu0
    %v117 = vadd.f32 %v44, %v116
    %v118 = vpop.f32.mrb[0].mxu0
    %119 = vdwg.mxu0
    %v120 = vmax.f32 %v117, 0.0
    %v121 = vld [vmem:[%s3] sm:$0xff]
    %v122 = vld [vmem:[%s3 + $0x8] sm:$0xff]
    %v123 = vld [vmem:[%s4] sm:$0xff]
    %v124 = vld [vmem:[%s4 + $0x8] sm:$0xff]
    %126 = vset.pattern.permute.xlu0 0
    %127 = vperm.xlu0 %126, %v123
    %v128 = vpop.permute.xlu0 %127
    %131 = vset.pattern.permute.xlu0 0
    %132 = vperm.xlu0 %131, %v124
    %v133 = vpop.permute.xlu0 %132
    %vm135 = vcmask 523264
    %v137 = vsel %vm135, %v121, 0
    %v140 = vsel %vm135, %v122, 0
    %v143 = vsel %vm135, %v120, 0
    %145 = vmatprep.subr.mxu0 0.0
    %146 = vmatpush1.xpose.msra.mxu0 %v143
    %147 = vmatprep.subr.mxu0 0.0
    %148 = vmatpush1.xpose.msra.mxu0 0.0
    %149 = vmatprep.subr.mxu0 0.0
    %150 = vmatpush1.xpose.msra.mxu0 0.0
    %151 = vmatprep.subr.mxu0 0.0
    %152 = vmatpush1.xpose.msra.mxu0 0.0
    %153 = vmatprep.subr.mxu0 0.0
    %154 = vmatpush1.xpose.msra.mxu0 0.0
    %155 = vmatprep.subr.mxu0 0.0
    %156 = vmatpush1.xpose.msra.mxu0 0.0
    %157 = vmatprep.subr.mxu0 0.0
    %158 = vmatpush1.xpose.msra.mxu0 0.0
    %159 = vmatprep.subr.mxu0 0.0
    %160 = vmatpush1.xpose.msra.mxu0 0.0
    %161 = vmatprep.subr.mxu0 0.0
    %162 = vmatpush1.xpose.msra.mxu0 0.0
    %163 = vmatprep.subr.mxu0 0.0
    %164 = vmatpush1.xpose.msra.mxu0 0.0
    %165 = vmatprep.subr.mxu0 0.0
    %166 = vmatpush1.xpose.msra.mxu0 0.0
    %167 = vmatprep.subr.mxu0 0.0
    %168 = vmatpush1.xpose.msra.mxu0 0.0
    %169 = vmatprep.subr.mxu0 0.0
    %170 = vmatpush1.xpose.msra.mxu0 0.0
    %171 = vmatprep.subr.mxu0 0.0
    %172 = vmatpush1.xpose.msra.mxu0 0.0
    %173 = vmatprep.subr.mxu0 0.0
    %174 = vmatpush1.xpose.msra.mxu0 0.0
    %175 = vmatprep.subr.mxu0 0.0
    %176 = vmatpush1.xpose.msra.mxu0 0.0
    %177 = vmatprep.subr.mxu0 0.0
    %178 = vmatpush1.xpose.msra.mxu0 0.0
    %179 = vmatprep.subr.mxu0 0.0
    %180 = vmatpush1.xpose.msra.mxu0 0.0
    %181 = vmatprep.subr.mxu0 0.0
    %182 = vmatpush1.xpose.msra.mxu0 0.0
    %183 = vmatprep.subr.mxu0 0.0
    %184 = vmatpush1.xpose.msra.mxu0 0.0
    %185 = vmatprep.subr.mxu0 0.0
    %186 = vmatpush1.xpose.msra.mxu0 0.0
    %187 = vmatprep.subr.mxu0 0.0
    %188 = vmatpush1.xpose.msra.mxu0 0.0
    %189 = vmatprep.subr.mxu0 0.0
    %190 = vmatpush1.xpose.msra.mxu0 0.0
    %191 = vmatprep.subr.mxu0 0.0
    %192 = vmatpush1.xpose.msra.mxu0 0.0
    %193 = vmatprep.subr.mxu0 0.0
    %194 = vmatpush1.xpose.msra.mxu0 0.0
    %195 = vmatprep.subr.mxu0 0.0
    %196 = vmatpush1.xpose.msra.mxu0 0.0
    %197 = vmatprep.subr.mxu0 0.0
    %198 = vmatpush1.xpose.msra.mxu0 0.0
    %199 = vmatprep.subr.mxu0 0.0
    %200 = vmatpush1.xpose.msra.mxu0 0.0
    %201 = vmatprep.subr.mxu0 0.0
    %202 = vmatpush1.xpose.msra.mxu0 0.0
    %203 = vmatprep.subr.mxu0 0.0
    %204 = vmatpush1.xpose.msra.mxu0 0.0
    %205 = vmatprep.subr.mxu0 0.0
    %206 = vmatpush1.xpose.msra.mxu0 0.0
    %207 = vmatprep.subr.mxu0 0.0
    %208 = vmatpush1.xpose.msra.mxu0 0.0
    %209 = vmatprep.mubr.f32.mxu0 0.0
    %210 = vmatmul.mubr.f32.gmra.mrb[0].mxu0 %v137
    %v211 = vpop.f32.mrb[0].mxu0
    %v212 = vadd.f32 %v128, %v211
    %v213 = vpop.f32.mrb[0].mxu0
    %214 = vmatprep.mubr.f32.mxu0 0.0
    %215 = vmatmul.mubr.f32.gmra.mrb[0].mxu0 %v140
    %v216 = vpop.f32.mrb[0].mxu0
    %v217 = vadd.f32 %v133, %v216
    %v218 = vpop.f32.mrb[0].mxu0
    %219 = vdwg.mxu0
    %vm220 = vcmask 64512
    %221 = vst.msk [vmem:[%s5] sm:$0xff] %vm220, %v212
    %222 = vst.msk [vmem:[%s5 + $0x8] sm:$0xff] %vm220, %v217
    // Predicated region
    $region26: #{classifier_forward.1} parent=1 // pred_check
      _
    $region27: #{classifier_forward.1} parent=1 // pred_check_branch
      %224 = sbr.rel (0) target = $region29
    $region28: #{classifier_forward.1} parent=1 // pred_region
      _
    $region29: #{classifier_forward.1} parent=1 // pred_fallthru
      _
    // Predicated region
    $region30: #{classifier_forward.1} parent=1 // pred_check
      _
    $region31: #{classifier_forward.1} parent=1 // pred_check_branch
      %226 = sbr.rel (0) target = $region33
    $region32: #{classifier_forward.1} parent=1 // pred_region
      _
    $region33: #{classifier_forward.1} parent=1 // pred_fallthru
      _
    %227 = vsyncpa [#allocation3], 1

</llo_original>
